<compile_context>
chip_gen: v5e
topology: v5e:2x2
jax: 0.10.0
libtpu: 0.0.40
codegen_flags: <defaults>
</compile_context>

<pallas_src>
import functools

import jax
import jax.numpy as jnp
from jax.experimental import pallas as pl
from jax.experimental.pallas import tpu as pltpu

K_PAD = 8     # fc1 contraction dim padded from 6
N_PAD = 128   # fc3 output dim padded from 2 (lane-dense stores, no vst.msk)
SUB = 16      # sublane granularity for bf16 batch tiles


def _round_up(x, m):
    return (x + m - 1) // m * m


def _batch_tile(batch, tb):
    """Batch tile: multiple of SUB, capped so the grid has >= 2 steps (v7x)."""
    tb = max(SUB, _round_up(int(tb), SUB))
    half = max(SUB, _round_up(-(-batch // 2), SUB))
    return min(tb, half)


def actor_kernel(x_ref, w1_ref, b1_ref, w2_ref, b2_ref, w3_ref, b3_ref, out_ref):
    # fc1: [TB,8](bf16) @ [8,256](bf16) -> f32, +b1, relu, -> bf16
    h1 = jnp.dot(x_ref[...], w1_ref[...], preferred_element_type=jnp.float32)
    h1 = jnp.maximum(h1 + b1_ref[...], 0.0).astype(jnp.bfloat16)
    # fc2: [TB,256] @ [256,256] -> f32, +b2, relu, -> bf16   (dominant matmul)
    h2 = jnp.dot(h1, w2_ref[...], preferred_element_type=jnp.float32)
    h2 = jnp.maximum(h2 + b2_ref[...], 0.0).astype(jnp.bfloat16)
    # fc3: [TB,256] @ [256,128] -> f32, +b3, tanh  (lane-dense padded output)
    h3 = jnp.dot(h2, w3_ref[...], preferred_element_type=jnp.float32)
    # max_action == 1.0 in the reference module, so no final scale is needed.
    out_ref[...] = jnp.tanh(h3 + b3_ref[...]).astype(out_ref.dtype)


def _actor_pallas(x_pad, w1, b1, w2, b2, w3, b3, tb):
    """x_pad: (B_pad, K_PAD) bf16 with B_pad % tb == 0 -> (B_pad, N_PAD) bf16."""
    B_pad = x_pad.shape[0]
    # Constant block index -> weights/biases stay VMEM-resident across steps.
    const2d = lambda a: pl.BlockSpec(a.shape, lambda i: (0, 0))
    return pl.pallas_call(
        actor_kernel,
        out_shape=jax.ShapeDtypeStruct((B_pad, N_PAD), jnp.bfloat16),
        grid=(B_pad // tb,),
        in_specs=[
            pl.BlockSpec((tb, K_PAD), lambda i: (i, 0)),   # x: pipelined per step
            const2d(w1), const2d(b1),
            const2d(w2), const2d(b2),
            const2d(w3), const2d(b3),
        ],
        out_specs=pl.BlockSpec((tb, N_PAD), lambda i: (i, 0)),
        compiler_params=pltpu.CompilerParams(
            dimension_semantics=("parallel",),
            vmem_limit_bytes=32 * 1024 * 1024,  # > v5e's 16 MiB scoped default
        ),
    )(x_pad, w1, b1, w2, b2, w3, b3)


def pack_params(params):
    """Pad + cast PyTorch-layout params ((in,out) weights, (out,) biases)."""
    w1, b1, w2, b2, w3, b3 = params
    w1p = jnp.zeros((K_PAD, 256), jnp.bfloat16).at[:6, :].set(w1.astype(jnp.bfloat16))
    w2p = w2.astype(jnp.bfloat16)
    w3p = jnp.zeros((256, N_PAD), jnp.bfloat16).at[:, :2].set(w3.astype(jnp.bfloat16))
    b1p = b1.reshape(1, 256).astype(jnp.float32)
    b2p = b2.reshape(1, 256).astype(jnp.float32)
    b3p = jnp.zeros((1, N_PAD), jnp.float32).at[0, :2].set(b3.astype(jnp.float32))
    return (w1p, b1p, w2p, b2p, w3p, b3p)


@functools.partial(jax.jit, static_argnames=("tb",))
def actor_forward_padded(x_pad, packed_params, tb=1024):
    """Pad-free fast path: x_pad is (B_pad, 8) bf16 (B_pad a multiple of 16).

    Returns the padded (B_pad, 128) bf16 output so an enclosing jit can slice
    [:, :2] lazily instead of paying standalone pad/slice HBM passes.
    """
    B_pad = x_pad.shape[0]
    assert B_pad % SUB == 0, "pre-padded batch must be a multiple of 16"
    TB = _batch_tile(B_pad, tb)
    while B_pad % TB:            # shrink (statically) to a divisor of B_pad
        TB -= SUB
    return _actor_pallas(x_pad, *packed_params, tb=TB)


@functools.partial(jax.jit, static_argnames=("tb",))
def actor_forward(state, packed_params, tb=1024):
    """state: [B, 6] float32 -> action: [B, 2] float32 (max_action = 1.0)."""
    B = state.shape[0]
    TB = _batch_tile(B, tb)
    B_pad = _round_up(B, TB)
    # Pad features 6 -> 8 and batch to a tile multiple; cast to bf16 here so the
    # kernel's x stream (HBM/DMA/VMEM) is half-width and needs no in-kernel cast.
    x = jnp.pad(state, ((0, B_pad - B), (0, K_PAD - 6))).astype(jnp.bfloat16)
    out = _actor_pallas(x, *packed_params, tb=TB)
    return out[:B, :2].astype(jnp.float32)


def init_params(key):
    """Deterministic init matching nn.Linear shapes (weights stored as [in, out])."""
    k1, k2, k3, k4, k5, k6 = jax.random.split(key, 6)

    def uniform(k, shape, fan_in):
        bound = 1.0 / jnp.sqrt(fan_in)
        return jax.random.uniform(k, shape, jnp.float32, -bound, bound)

    w1 = uniform(k1, (6, 256), 6.0)
    b1 = uniform(k2, (256,), 6.0)
    w2 = uniform(k3, (256, 256), 256.0)
    b2 = uniform(k4, (256,), 256.0)
    w3 = uniform(k5, (256, 2), 256.0)
    b3 = uniform(k6, (2,), 256.0)
    return (w1, b1, w2, b2, w3, b3)


def actor_reference(state, params):
    """Reference that applies the same bf16 quantization as the kernel
    (bf16 x/weights/activations, f32 accumulation, bf16 output)."""
    w1, b1, w2, b2, w3, b3 = params
    q = lambda a: a.astype(jnp.bfloat16)
    h1 = jnp.maximum(
        jnp.dot(q(state), q(w1), preferred_element_type=jnp.float32) + b1, 0.0)
    h2 = jnp.maximum(
        jnp.dot(q(h1), q(w2), preferred_element_type=jnp.float32) + b2, 0.0)
    a = jnp.tanh(jnp.dot(q(h2), q(w3), preferred_element_type=jnp.float32) + b3)
    return (a * 1.0).astype(jnp.bfloat16).astype(jnp.float32)  # max_action = 1.0


if __name__ == "__main__":
    key = jax.random.PRNGKey(0)
    pkey, xkey = jax.random.split(key)

    params = init_params(pkey)
    packed = pack_params(params)

    # Small batch that is not a tile multiple -> exercises batch padding and the
    # >=2-step grid path (TB collapses to 32 here; large B uses TB up to `tb`).
    B = 50
    state = jax.random.normal(xkey, (B, 6), dtype=jnp.float32)

    action = actor_forward(state, packed)
    jax.block_until_ready(action)

    ref = actor_reference(state, params)
    assert action.shape == (B, 2)
    max_err = float(jnp.max(jnp.abs(action - ref)))
    # Kernel and reference share the same bf16 quantization; tolerance covers
    # MXU vs. XLA accumulation-order differences plus bf16 output rounding.
    assert jnp.allclose(action, ref, atol=2e-2, rtol=2e-2), max_err
    print("KERNEL_OK")
</pallas_src>

<mosaic_0001>
module attributes {stable_mosaic.version = 11 : i64} {
  func.func @actor_kernel(%arg0: i32, %arg1: memref<32x8xbf16, #tpu.memory_space<vmem>>, %arg2: memref<8x256xbf16, #tpu.memory_space<vmem>>, %arg3: memref<1x256xf32, #tpu.memory_space<vmem>>, %arg4: memref<256x256xbf16, #tpu.memory_space<vmem>>, %arg5: memref<1x256xf32, #tpu.memory_space<vmem>>, %arg6: memref<256x128xbf16, #tpu.memory_space<vmem>>, %arg7: memref<1x128xf32, #tpu.memory_space<vmem>>, %arg8: memref<32x128xbf16, #tpu.memory_space<vmem>>) attributes {dimension_semantics = [#tpu.dimension_semantics<parallel>], iteration_bounds = array<i64: 2>, scalar_prefetch = 0 : i64, scratch_operands = 0 : i64, tpu.core_type = #tpu.core_type<tc>, window_params = [{transform_indices = @transform_0, window_bounds = array<i64: 32, 8>}, {pipeline_mode = #tpu.pipeline_mode<synchronous>, transform_indices = @transform_1, window_bounds = array<i64: 8, 256>}, {pipeline_mode = #tpu.pipeline_mode<synchronous>, transform_indices = @transform_2, window_bounds = array<i64: 1, 256>}, {pipeline_mode = #tpu.pipeline_mode<synchronous>, transform_indices = @transform_3, window_bounds = array<i64: 256, 256>}, {pipeline_mode = #tpu.pipeline_mode<synchronous>, transform_indices = @transform_4, window_bounds = array<i64: 1, 256>}, {pipeline_mode = #tpu.pipeline_mode<synchronous>, transform_indices = @transform_5, window_bounds = array<i64: 256, 128>}, {pipeline_mode = #tpu.pipeline_mode<synchronous>, transform_indices = @transform_6, window_bounds = array<i64: 1, 128>}, {transform_indices = @transform_7, window_bounds = array<i64: 32, 128>}]} {
    %c0 = arith.constant 0 : index
    %c0_0 = arith.constant 0 : index
    %0 = vector.load %arg1[%c0, %c0_0] : memref<32x8xbf16, #tpu.memory_space<vmem>>, vector<32x8xbf16>
    %c0_1 = arith.constant 0 : index
    %c0_2 = arith.constant 0 : index
    %1 = vector.load %arg2[%c0_1, %c0_2] : memref<8x256xbf16, #tpu.memory_space<vmem>>, vector<8x256xbf16>
    %cst = arith.constant dense<0.000000e+00> : vector<32x256xf32>
    %2 = tpu.matmul %0, %1, %cst {dimension_numbers = #tpu.dot_dimension_numbers<[1], [0], [0], [1], [0, 0, 1, 1], [], []>} : vector<32x8xbf16>, vector<8x256xbf16>, vector<32x256xf32> -> vector<32x256xf32>
    %c0_3 = arith.constant 0 : index
    %c0_4 = arith.constant 0 : index
    %3 = vector.load %arg3[%c0_3, %c0_4] : memref<1x256xf32, #tpu.memory_space<vmem>>, vector<1x256xf32>
    %4 = vector.broadcast %3 : vector<1x256xf32> to vector<32x256xf32>
    %5 = arith.addf %2, %4 : vector<32x256xf32>
    %cst_5 = arith.constant 0.000000e+00 : f32
    %6 = vector.broadcast %cst_5 : f32 to vector<32x256xf32>
    %7 = arith.maximumf %5, %6 : vector<32x256xf32>
    %8 = arith.truncf %7 : vector<32x256xf32> to vector<32x256xbf16>
    %c0_6 = arith.constant 0 : index
    %c0_7 = arith.constant 0 : index
    %9 = vector.load %arg4[%c0_6, %c0_7] : memref<256x256xbf16, #tpu.memory_space<vmem>>, vector<256x256xbf16>
    %cst_8 = arith.constant dense<0.000000e+00> : vector<32x256xf32>
    %10 = tpu.matmul %8, %9, %cst_8 {dimension_numbers = #tpu.dot_dimension_numbers<[1], [0], [0], [1], [0, 0, 1, 1], [], []>} : vector<32x256xbf16>, vector<256x256xbf16>, vector<32x256xf32> -> vector<32x256xf32>
    %c0_9 = arith.constant 0 : index
    %c0_10 = arith.constant 0 : index
    %11 = vector.load %arg5[%c0_9, %c0_10] : memref<1x256xf32, #tpu.memory_space<vmem>>, vector<1x256xf32>
    %12 = vector.broadcast %11 : vector<1x256xf32> to vector<32x256xf32>
    %13 = arith.addf %10, %12 : vector<32x256xf32>
    %cst_11 = arith.constant 0.000000e+00 : f32
    %14 = vector.broadcast %cst_11 : f32 to vector<32x256xf32>
    %15 = arith.maximumf %13, %14 : vector<32x256xf32>
    %16 = arith.truncf %15 : vector<32x256xf32> to vector<32x256xbf16>
    %c0_12 = arith.constant 0 : index
    %c0_13 = arith.constant 0 : index
    %17 = vector.load %arg6[%c0_12, %c0_13] : memref<256x128xbf16, #tpu.memory_space<vmem>>, vector<256x128xbf16>
    %cst_14 = arith.constant dense<0.000000e+00> : vector<32x128xf32>
    %18 = tpu.matmul %16, %17, %cst_14 {dimension_numbers = #tpu.dot_dimension_numbers<[1], [0], [0], [1], [0, 0, 1, 1], [], []>} : vector<32x256xbf16>, vector<256x128xbf16>, vector<32x128xf32> -> vector<32x128xf32>
    %c0_15 = arith.constant 0 : index
    %c0_16 = arith.constant 0 : index
    %19 = vector.load %arg7[%c0_15, %c0_16] : memref<1x128xf32, #tpu.memory_space<vmem>>, vector<1x128xf32>
    %20 = vector.broadcast %19 : vector<1x128xf32> to vector<32x128xf32>
    %21 = arith.addf %18, %20 : vector<32x128xf32>
    %22 = math.tanh %21 : vector<32x128xf32>
    %23 = arith.truncf %22 : vector<32x128xf32> to vector<32x128xbf16>
    %c0_17 = arith.constant 0 : index
    %c0_18 = arith.constant 0 : index
    %24 = vector.load %arg8[%c0_17, %c0_18] : memref<32x128xbf16, #tpu.memory_space<vmem>>, vector<32x128xbf16>
    tpu.vector_store %arg8[%c0_17, %c0_18], %23 {strides = array<i32>} : memref<32x128xbf16, #tpu.memory_space<vmem>>, vector<32x128xbf16>,
    return
  }
  func.func @transform_0(%arg0: i32) -> (i32, i32) {
    %c0_i32 = arith.constant 0 : i32
    %c0_i32_0 = arith.constant 0 : i32
    return %arg0, %c0_i32 : i32, i32
  }
  func.func @transform_1(%arg0: i32) -> (i32, i32) {
    %c0_i32 = arith.constant 0 : i32
    %c0_i32_0 = arith.constant 0 : i32
    %c0_i32_1 = arith.constant 0 : i32
    return %c0_i32, %c0_i32_0 : i32, i32
  }
  func.func @transform_2(%arg0: i32) -> (i32, i32) {
    %c0_i32 = arith.constant 0 : i32
    %c0_i32_0 = arith.constant 0 : i32
    %c0_i32_1 = arith.constant 0 : i32
    return %c0_i32, %c0_i32_0 : i32, i32
  }
  func.func @transform_3(%arg0: i32) -> (i32, i32) {
    %c0_i32 = arith.constant 0 : i32
    %c0_i32_0 = arith.constant 0 : i32
    %c0_i32_1 = arith.constant 0 : i32
    return %c0_i32, %c0_i32_0 : i32, i32
  }
  func.func @transform_4(%arg0: i32) -> (i32, i32) {
    %c0_i32 = arith.constant 0 : i32
    %c0_i32_0 = arith.constant 0 : i32
    %c0_i32_1 = arith.constant 0 : i32
    return %c0_i32, %c0_i32_0 : i32, i32
  }
  func.func @transform_5(%arg0: i32) -> (i32, i32) {
    %c0_i32 = arith.constant 0 : i32
    %c0_i32_0 = arith.constant 0 : i32
    %c0_i32_1 = arith.constant 0 : i32
    return %c0_i32, %c0_i32_0 : i32, i32
  }
  func.func @transform_6(%arg0: i32) -> (i32, i32) {
    %c0_i32 = arith.constant 0 : i32
    %c0_i32_0 = arith.constant 0 : i32
    %c0_i32_1 = arith.constant 0 : i32
    return %c0_i32, %c0_i32_0 : i32, i32
  }
  func.func @transform_7(%arg0: i32) -> (i32, i32) {
    %c0_i32 = arith.constant 0 : i32
    %c0_i32_0 = arith.constant 0 : i32
    return %arg0, %c0_i32 : i32, i32
  }
}

</mosaic_0001>

<llo_original>
// kernel: actor_forward.1
$region0: #{actor_forward.1}
  #allocation0 [shape = 'u32[]', space=smem, size = 0x4, offset = 0x4, fixed_abs, tag = 'smem constant byte address 0x4 - core index']
  #allocation1 [shape = 'u32[72,128]{1,0:T(1,128)}', space=vmem, size = 0x9000, scoped, tag = 'internal scratch']
  %s0 = inlined_call_operand.vmem [shape: bf16[64,8], index: 0, kind: input, shape index: {}]
  %s1 = inlined_call_operand.vmem [shape: bf16[8,256], index: 1, kind: input, shape index: {}]
  %s2 = inlined_call_operand.vmem [shape: f32[1,256], index: 2, kind: input, shape index: {}]
  %s3 = inlined_call_operand.hbm [shape: bf16[256,256], index: 3, kind: input, shape index: {}]
  %s4 = inlined_call_operand.vmem [shape: f32[1,256], index: 4, kind: input, shape index: {}]
  %s5 = inlined_call_operand.hbm [shape: bf16[256,128], index: 5, kind: input, shape index: {}]
  %s6 = inlined_call_operand.vmem [shape: f32[1,128], index: 6, kind: input, shape index: {}]
  %s7 = inlined_call_operand.vmem [shape: bf16[64,128], index: 7, kind: output, shape index: {}]
  %s8 = sld [smem:[#allocation0]]
  $region69: #{actor_forward.1} parent=0
    _
  %s10 = ssub.s32 1, %s8
  %s11 = scalar_select 0, %s10, %s8
  $region1: #{actor_forward.1} parent=0
    #allocation2 [shape = 'u8[131072]{0}', space=vmem, size = 0x20000, scoped, tag = 'input window, operand 3, single buffered']
    #allocation3 [shape = 's32[2]{0}', space=sflag, size = 0x8, scoped, tag = 'scoped memory for actor_forward.1']
    #allocation4 [shape = 'u8[65536]{0}', space=vmem, size = 0x10000, scoped, tag = 'input window, operand 5, single buffered']
    #allocation5 [shape = 's32[1]{0}', space=sflag, size = 0x4, scoped, tag = 'scoped memory for actor_forward.1']
    %12 = vsyncpa [#allocation3], 0
    %13 = vsyncpa [#allocation5], 0
    loop: start=0, step=1, limit=4
    $region2: #{actor_forward.1} parent=1 // loop_pre_header
      _
    $region3: #{actor_forward.1} parent=1 // loop_header
      %s15 = sphi 0, %s19
      %p16 = scmp.ge.s32.totalorder %s15, 4
      %s25 = sphi 0, %s27
      %s28 = sphi 0, %s25
      %s29 = sphi 0, %s28
      %s45 = sphi 0, %s29
      %s49 = sphi 0, %s49
      %s51 = sphi 0, %s49
      %s52 = sphi 0, %s51
      %s66 = sphi 0, %s52
      %s70 = sphi 0, %s70
      %s72 = sphi 0, %s70
      %s73 = sphi 0, %s72
      %s87 = sphi 0, %s73
      %s91 = sphi 0, %s91
      %s93 = sphi 0, %s91
      %s94 = sphi 0, %s93
      %s108 = sphi 0, %s94
      %s112 = sphi 0, %s112
      %s114 = sphi 0, %s112
      %s115 = sphi 0, %s114
      %s129 = sphi 0, %s115
      %s133 = sphi 0, %s133
      %s135 = sphi 0, %s133
      %s136 = sphi 0, %s135
      %s150 = sphi 0, %s136
      %s154 = sphi 0, %s154
      %s156 = sphi 0, %s154
      %s157 = sphi 0, %s156
      %s171 = sphi 0, %s157
      %s177 = sphi 0, %s179
      %s180 = sphi 0, %s177
      %s181 = sphi 0, %s180
      %s197 = sphi 0, %s181
    $region4: #{actor_forward.1} parent=1 // loop_header_branch
      %18 = sbr.rel (%p16) target = $region8
    $region5: #{actor_forward.1} parent=1 // loop_body
      %s20 = ssub.s32 %s15, 1
      %s21 = ssub.s32 %s15, 2
      %s22 = sadd.s32 %s15, 1
      %s23 = ssub.s32 %s15, %s22
      %p24 = scmp.eq.s32.totalorder %s23, 0
      %s26 = sadd.s32 %s25, 1
      %s27 = scalar_select %p24, %s25, %s26
      %p30 = pneg %p24
      %p31 = scmp.eq.s32.totalorder %s15, 1
      %p32 = por %p30, %p31
      %p33 = scmp.ne.s32.totalorder %s25, %s28
      %p34 = scmp.eq.s32.totalorder %s15, 0
      %p35 = por %p33, %p34
      %p36 = scmp.ne.s32.totalorder %s25, %s28
      %p37 = scmp.eq.s32.totalorder %s20, 1
      %p38 = por %p36, %p37
      %p39 = scmp.ne.s32.totalorder %s28, %s29
      %p40 = scmp.eq.s32.totalorder %s20, 0
      %p41 = por %p39, %p40
      %p42 = scmp.ne.s32.totalorder %s28, %s29
      %p43 = scmp.eq.s32.totalorder %s21, 1
      %p44 = por %p42, %p43
      %p46 = scmp.ne.s32.totalorder %s29, %s45
      %p47 = scmp.eq.s32.totalorder %s21, 0
      %p48 = por %p46, %p47
      %s50 = sadd.s32 %s49, 1
      %p53 = scmp.eq.s32.totalorder %s15, 1
      %p54 = scmp.ne.s32.totalorder %s49, %s51
      %p55 = scmp.eq.s32.totalorder %s15, 0
      %p56 = por %p54, %p55
      %p57 = scmp.ne.s32.totalorder %s49, %s51
      %p58 = scmp.eq.s32.totalorder %s20, 1
      %p59 = por %p57, %p58
      %p60 = scmp.ne.s32.totalorder %s51, %s52
      %p61 = scmp.eq.s32.totalorder %s20, 0
      %p62 = por %p60, %p61
      %p63 = scmp.ne.s32.totalorder %s51, %s52
      %p64 = scmp.eq.s32.totalorder %s21, 1
      %p65 = por %p63, %p64
      %p67 = scmp.ne.s32.totalorder %s52, %s66
      %p68 = scmp.eq.s32.totalorder %s21, 0
      %p69 = por %p67, %p68
      %s71 = sadd.s32 %s70, 1
      %p74 = scmp.eq.s32.totalorder %s15, 1
      %p75 = scmp.ne.s32.totalorder %s70, %s72
      %p76 = scmp.eq.s32.totalorder %s15, 0
      %p77 = por %p75, %p76
      %p78 = scmp.ne.s32.totalorder %s70, %s72
      %p79 = scmp.eq.s32.totalorder %s20, 1
      %p80 = por %p78, %p79
      %p81 = scmp.ne.s32.totalorder %s72, %s73
      %p82 = scmp.eq.s32.totalorder %s20, 0
      %p83 = por %p81, %p82
      %p84 = scmp.ne.s32.totalorder %s72, %s73
      %p85 = scmp.eq.s32.totalorder %s21, 1
      %p86 = por %p84, %p85
      %p88 = scmp.ne.s32.totalorder %s73, %s87
      %p89 = scmp.eq.s32.totalorder %s21, 0
      %p90 = por %p88, %p89
      %s92 = sadd.s32 %s91, 1
      %p95 = scmp.eq.s32.totalorder %s15, 1
      %p96 = scmp.ne.s32.totalorder %s91, %s93
      %p97 = scmp.eq.s32.totalorder %s15, 0
      %p98 = por %p96, %p97
      %p99 = scmp.ne.s32.totalorder %s91, %s93
      %p100 = scmp.eq.s32.totalorder %s20, 1
      %p101 = por %p99, %p100
      %p102 = scmp.ne.s32.totalorder %s93, %s94
      %p103 = scmp.eq.s32.totalorder %s20, 0
      %p104 = por %p102, %p103
      %p105 = scmp.ne.s32.totalorder %s93, %s94
      %p106 = scmp.eq.s32.totalorder %s21, 1
      %p107 = por %p105, %p106
      %p109 = scmp.ne.s32.totalorder %s94, %s108
      %p110 = scmp.eq.s32.totalorder %s21, 0
      %p111 = por %p109, %p110
      %s113 = sadd.s32 %s112, 1
      %p116 = scmp.eq.s32.totalorder %s15, 1
      %p117 = scmp.ne.s32.totalorder %s112, %s114
      %p118 = scmp.eq.s32.totalorder %s15, 0
      %p119 = por %p117, %p118
      %p120 = scmp.ne.s32.totalorder %s112, %s114
      %p121 = scmp.eq.s32.totalorder %s20, 1
      %p122 = por %p120, %p121
      %p123 = scmp.ne.s32.totalorder %s114, %s115
      %p124 = scmp.eq.s32.totalorder %s20, 0
      %p125 = por %p123, %p124
      %p126 = scmp.ne.s32.totalorder %s114, %s115
      %p127 = scmp.eq.s32.totalorder %s21, 1
      %p128 = por %p126, %p127
      %p130 = scmp.ne.s32.totalorder %s115, %s129
      %p131 = scmp.eq.s32.totalorder %s21, 0
      %p132 = por %p130, %p131
      %s134 = sadd.s32 %s133, 1
      %p137 = scmp.eq.s32.totalorder %s15, 1
      %p138 = scmp.ne.s32.totalorder %s133, %s135
      %p139 = scmp.eq.s32.totalorder %s15, 0
      %p140 = por %p138, %p139
      %p141 = scmp.ne.s32.totalorder %s133, %s135
      %p142 = scmp.eq.s32.totalorder %s20, 1
      %p143 = por %p141, %p142
      %p144 = scmp.ne.s32.totalorder %s135, %s136
      %p145 = scmp.eq.s32.totalorder %s20, 0
      %p146 = por %p144, %p145
      %p147 = scmp.ne.s32.totalorder %s135, %s136
      %p148 = scmp.eq.s32.totalorder %s21, 1
      %p149 = por %p147, %p148
      %p151 = scmp.ne.s32.totalorder %s136, %s150
      %p152 = scmp.eq.s32.totalorder %s21, 0
      %p153 = por %p151, %p152
      %s155 = sadd.s32 %s154, 1
      %p158 = scmp.eq.s32.totalorder %s15, 1
      %p159 = scmp.ne.s32.totalorder %s154, %s156
      %p160 = scmp.eq.s32.totalorder %s15, 0
      %p161 = por %p159, %p160
      %p162 = scmp.ne.s32.totalorder %s154, %s156
      %p163 = scmp.eq.s32.totalorder %s20, 1
      %p164 = por %p162, %p163
      %p165 = scmp.ne.s32.totalorder %s156, %s157
      %p166 = scmp.eq.s32.totalorder %s20, 0
      %p167 = por %p165, %p166
      %p168 = scmp.ne.s32.totalorder %s156, %s157
      %p169 = scmp.eq.s32.totalorder %s21, 1
      %p170 = por %p168, %p169
      %p172 = scmp.ne.s32.totalorder %s157, %s171
      %p173 = scmp.eq.s32.totalorder %s21, 0
      %p174 = por %p172, %p173
      %s175 = ssub.s32 %s15, %s22
      %p176 = scmp.eq.s32.totalorder %s175, 0
      %s178 = sadd.s32 %s177, 1
      %s179 = scalar_select %p176, %s177, %s178
      %p182 = pneg %p176
      %p183 = scmp.eq.s32.totalorder %s15, 1
      %p184 = por %p182, %p183
      %p185 = scmp.ne.s32.totalorder %s177, %s180
      %p186 = scmp.eq.s32.totalorder %s15, 0
      %p187 = por %p185, %p186
      %p188 = scmp.ne.s32.totalorder %s177, %s180
      %p189 = scmp.eq.s32.totalorder %s20, 1
      %p190 = por %p188, %p189
      %p191 = scmp.ne.s32.totalorder %s180, %s181
      %p192 = scmp.eq.s32.totalorder %s20, 0
      %p193 = por %p191, %p192
      %p194 = scmp.ne.s32.totalorder %s180, %s181
      %p195 = scmp.eq.s32.totalorder %s21, 1
      %p196 = por %p194, %p195
      %p198 = scmp.ne.s32.totalorder %s181, %s197
      %p199 = scmp.eq.s32.totalorder %s21, 0
      %p200 = por %p198, %p199
      %p201 = scmp.le.s32.totalorder 1, %s15
      %p202 = scmp.lt.s32.totalorder %s15, 3
      %p203 = pnand %p201, %p202
      %p204 = pneg %p203
      // Predicated region
      $region9: #{actor_forward.1} parent=5 // pred_check
        _
      $region10: #{actor_forward.1} parent=5 // pred_check_branch
        %206 = sbr.rel (%p203) target = $region12
      $region11: #{actor_forward.1} parent=5 // pred_region
        %s207 = ssub.s32 %s15, 1
        // Predicated region
        $region13: #{actor_forward.1} parent=11 // pred_check
          %p208 = pneg %p62
        $region14: #{actor_forward.1} parent=11 // pred_check_branch
          %210 = sbr.rel (%p208) target = $region16
        $region15: #{actor_forward.1} parent=11 // pred_region
          _
        $region16: #{actor_forward.1} parent=11 // pred_fallthru
          _
        // Predicated region
        $region17: #{actor_forward.1} parent=11 // pred_check
          %p211 = pneg %p83
        $region18: #{actor_forward.1} parent=11 // pred_check_branch
          %213 = sbr.rel (%p211) target = $region20
        $region19: #{actor_forward.1} parent=11 // pred_region
          _
        $region20: #{actor_forward.1} parent=11 // pred_fallthru
          _
        // Predicated region
        $region21: #{actor_forward.1} parent=11 // pred_check
          %p214 = pneg %p104
        $region22: #{actor_forward.1} parent=11 // pred_check_branch
          %216 = sbr.rel (%p214) target = $region24
        $region23: #{actor_forward.1} parent=11 // pred_region
          %218 = vsyncadd [#allocation3], 0
          %s219 = sshll.u32 %s3, 4
          %s220 = int_to_ptr.hbm [resolvable:$true] %s219
          %s221 = sshll.u32 [#allocation2], 4
          %s222 = int_to_ptr.vmem [resolvable:$true] %s221
          %227 = dma.hbm_to_vmem [thread:$0]  %s220, 4096, %s222, [#allocation3], 128, 128, 8
        $region24: #{actor_forward.1} parent=11 // pred_fallthru
          _
        // Predicated region
        $region25: #{actor_forward.1} parent=11 // pred_check
          %p228 = pneg %p125
        $region26: #{actor_forward.1} parent=11 // pred_check_branch
          %230 = sbr.rel (%p228) target = $region28
        $region27: #{actor_forward.1} parent=11 // pred_region
          _
        $region28: #{actor_forward.1} parent=11 // pred_fallthru
          _
        // Predicated region
        $region29: #{actor_forward.1} parent=11 // pred_check
          %p231 = pneg %p146
        $region30: #{actor_forward.1} parent=11 // pred_check_branch
          %233 = sbr.rel (%p231) target = $region32
        $region31: #{actor_forward.1} parent=11 // pred_region
          %235 = vsyncadd [#allocation5], 0
          %s236 = sshll.u32 %s5, 4
          %s237 = int_to_ptr.hbm [resolvable:$true] %s236
          %s238 = sshll.u32 [#allocation4], 4
          %s239 = int_to_ptr.vmem [resolvable:$true] %s238
          %244 = dma.hbm_to_vmem [thread:$0]  %s237, 2048, %s239, [#allocation5], 64, 64, 4
        $region32: #{actor_forward.1} parent=11 // pred_fallthru
          _
        // Predicated region
        $region33: #{actor_forward.1} parent=11 // pred_check
          %p245 = pneg %p167
        $region34: #{actor_forward.1} parent=11 // pred_check_branch
          %247 = sbr.rel (%p245) target = $region36
        $region35: #{actor_forward.1} parent=11 // pred_region
          _
        $region36: #{actor_forward.1} parent=11 // pred_fallthru
          _
      $region12: #{actor_forward.1} parent=5 // pred_fallthru
        _
      %p248 = scmp.lt.s32.totalorder %s15, 2
      // Predicated region
      $region37: #{actor_forward.1} parent=5 // pred_check
        %p249 = pneg %p248
      $region38: #{actor_forward.1} parent=5 // pred_check_branch
        %251 = sbr.rel (%p249) target = $region40
      $region39: #{actor_forward.1} parent=5 // pred_region
        // Predicated region
        $region41: #{actor_forward.1} parent=39 // pred_check
          %p252 = pneg %p35
        $region42: #{actor_forward.1} parent=39 // pred_check_branch
          %254 = sbr.rel (%p252) target = $region44
        $region43: #{actor_forward.1} parent=39 // pred_region
          %s255 = smul.u32 4, %s15
          %p256 = scmp.lt.s32.totalorder %s255, 7
          %s257 = scalar_select %p256, %s255, 7
          %s258 = smul.addr %s257, 4
          %s259 = scalar_lea.vmem %s0, %s258
          %s260 = smul.u32 4, %s15
        $region44: #{actor_forward.1} parent=39 // pred_fallthru
          _
      $region40: #{actor_forward.1} parent=5 // pred_fallthru
        _
      %p261 = scmp.le.s32.totalorder 1, %s15
      %p262 = scmp.lt.s32.totalorder %s15, 3
      %p263 = pnand %p261, %p262
      %p264 = pneg %p263
      // Predicated region
      $region45: #{actor_forward.1} parent=5 // pred_check
        _
      $region46: #{actor_forward.1} parent=5 // pred_check_branch
        %266 = sbr.rel (%p263) target = $region48
      $region47: #{actor_forward.1} parent=5 // pred_region
        %s267 = ssub.s32 %s15, 1
        // Predicated region
        $region49: #{actor_forward.1} parent=47 // pred_check
          %p268 = pneg %p104
        $region50: #{actor_forward.1} parent=47 // pred_check_branch
          %270 = sbr.rel (%p268) target = $region52
        $region51: #{actor_forward.1} parent=47 // pred_region
          %272 = dma.done [#allocation3], 4096
        $region52: #{actor_forward.1} parent=47 // pred_fallthru
          _
        // Predicated region
        $region53: #{actor_forward.1} parent=47 // pred_check
          %p273 = pneg %p146
        $region54: #{actor_forward.1} parent=47 // pred_check_branch
          %275 = sbr.rel (%p273) target = $region56
        $region55: #{actor_forward.1} parent=47 // pred_region
          %277 = dma.done [#allocation5], 2048
        $region56: #{actor_forward.1} parent=47 // pred_fallthru
          _
        %s278 = smul.u32 4, %s20
        %p279 = scmp.lt.s32.totalorder %s278, 7
        %s280 = scalar_select %p279, %s278, 7
        %s281 = smul.addr %s280, 4
        %s282 = scalar_lea.vmem %s0, %s281
        %p283 = pneg %p41
        %p284 = pneg %p38
        %p285 = pneg %p62
        %p286 = pneg %p59
        %p287 = pneg %p83
        %p288 = pneg %p80
        %p289 = pneg %p104
        %p290 = pneg %p101
        %p291 = pneg %p125
        %p292 = pneg %p122
        %p293 = pneg %p146
        %p294 = pneg %p143
        %p295 = pneg %p167
        %p296 = pneg %p164
        %p297 = pneg %p193
        %p298 = pneg %p190
        %s299 = smul.u32 4, %s20
        %p300 = scmp.lt.s32.totalorder %s299, 7
        %s301 = scalar_select %p300, %s299, 7
        %s302 = smul.addr %s301, 4
        %s303 = scalar_lea.vmem %s7, %s302
        %s304 = smul.u32 4, %s20
        %p305 = scmp.lt.s32.totalorder %s304, 7
        %s306 = scalar_select %p305, %s304, 7
        %s307 = smul.addr %s306, 4
        %s308 = scalar_lea.vmem %s0, %s307
        %s309 = smul.u32 4, %s20
        %s310 = smul.u32 4, %s20
        %p311 = scmp.lt.s32.totalorder %s310, 7
        %s312 = scalar_select %p311, %s310, 7
        %s313 = smul.addr %s312, 4
        %s314 = scalar_lea.vmem %s7, %s313
        %s315 = smul.u32 4, %s20
        %v317 = vld [vmem:[%s308] sm:$0xf]
        %v318 = vld [vmem:[%s308 + $0x4] sm:$0xf]
        %v319 = vld [vmem:[%s308 + $0x8] sm:$0xf]
        %v320 = vld [vmem:[%s308 + $0xc] sm:$0xf]
        %v321 = vld [vmem:[%s1] sm:$0xff]
        %v322 = vld [vmem:[%s2] sm:$0x3]
        %v324 = vperm.slane %v322, 0
        %v325 = vperm.slane %v322, 1
        %v332 = vunpack.c.l.b16 %v317
        %v333 = vunpack.c.l.b16 %v318
        %v334 = vunpack.c.l.b16 %v319
        %v335 = vunpack.c.l.b16 %v320
        %v336 = vpack.c.b16 %v333, %v332
        %v337 = vpack.c.b16 %v335, %v334
        %v339 = vunpack.c.l.b16 %v321
        %v340 = vunpack.c.h.b16 %v321
        %v341 = vpack.c.b16 %v339, %v339
        %v342 = vpack.c.b16 %v340, %v340
        %vm343 = vcmask 64512
        %v345 = vsel %vm343, %v336, 0
        %v348 = vsel %vm343, %v337, 0
        %vm350 = vcmask 1043456
        %v352 = vsel %vm350, %v341, 0
        %v355 = vsel %vm350, %v342, 0
        %357 = vmatpush.bf16.msra.mxu0 0
        %358 = vmatpush.bf16.msra.mxu0 0
        %359 = vmatpush.bf16.msra.mxu0 0
        %360 = vmatpush.bf16.msra.mxu0 0
        %361 = vmatpush.bf16.msra.mxu0 0
        %362 = vmatpush.bf16.msra.mxu0 0
        %363 = vmatpush.bf16.msra.mxu0 0
        %364 = vmatpush.bf16.msra.mxu0 %v352
        %365 = vmatmul.bf16.gmra.mxu0 %v345
        %v366 = vpop.f32.mrf.mxu0
        %v367 = vadd.f32 %v324, %v366
        %v368 = vpop.f32.mrf.mxu0
        %v369 = vadd.f32 %v324, %v368
        %370 = vmatmul.bf16.gmra.mxu0 %v348
        %v371 = vpop.f32.mrf.mxu0
        %v372 = vadd.f32 %v324, %v371
        %v373 = vpop.f32.mrf.mxu0
        %v374 = vadd.f32 %v324, %v373
        %375 = vdwg.mxu0
        %376 = vmatpush.bf16.msra.mxu0 0
        %377 = vmatpush.bf16.msra.mxu0 0
        %378 = vmatpush.bf16.msra.mxu0 0
        %379 = vmatpush.bf16.msra.mxu0 0
        %380 = vmatpush.bf16.msra.mxu0 0
        %381 = vmatpush.bf16.msra.mxu0 0
        %382 = vmatpush.bf16.msra.mxu0 0
        %383 = vmatpush.bf16.msra.mxu0 %v355
        %384 = vmatmul.bf16.gmra.mxu0 %v345
        %v385 = vpop.f32.mrf.mxu0
        %v386 = vadd.f32 %v325, %v385
        %v387 = vpop.f32.mrf.mxu0
        %v388 = vadd.f32 %v325, %v387
        %389 = vmatmul.bf16.gmra.mxu0 %v348
        %v390 = vpop.f32.mrf.mxu0
        %v391 = vadd.f32 %v325, %v390
        %v392 = vpop.f32.mrf.mxu0
        %v393 = vadd.f32 %v325, %v392
        %394 = vdwg.mxu0
        %v395 = vmax.f32 %v367, 0.0
        %v396 = vmax.f32 %v386, 0.0
        %v397 = vmax.f32 %v369, 0.0
        %v398 = vmax.f32 %v388, 0.0
        %v399 = vmax.f32 %v372, 0.0
        %v400 = vmax.f32 %v391, 0.0
        %v401 = vmax.f32 %v374, 0.0
        %v402 = vmax.f32 %v393, 0.0
        %v403 = vpack.c.bf16 %v397, %v395
        %v404 = vpack.c.bf16 %v398, %v396
        %v405 = vpack.c.bf16 %v401, %v399
        %v406 = vpack.c.bf16 %v402, %v400
        %v407 = vld [vmem:[#allocation2] sm:$0xff]
        %v408 = vld [vmem:[#allocation2 + $0x8] sm:$0xff]
        %v409 = vld [vmem:[#allocation2 + $0x10] sm:$0xff]
        %v410 = vld [vmem:[#allocation2 + $0x18] sm:$0xff]
        %v411 = vld [vmem:[#allocation2 + $0x20] sm:$0xff]
        %v412 = vld [vmem:[#allocation2 + $0x28] sm:$0xff]
        %v413 = vld [vmem:[#allocation2 + $0x30] sm:$0xff]
        %v414 = vld [vmem:[#allocation2 + $0x38] sm:$0xff]
        %v415 = vld [vmem:[#allocation2 + $0x40] sm:$0xff]
        %v416 = vld [vmem:[#allocation2 + $0x48] sm:$0xff]
        %v417 = vld [vmem:[#allocation2 + $0x50] sm:$0xff]
        %v418 = vld [vmem:[#allocation2 + $0x58] sm:$0xff]
        %v419 = vld [vmem:[#allocation2 + $0x60] sm:$0xff]
        %v420 = vld [vmem:[#allocation2 + $0x68] sm:$0xff]
        %v421 = vld [vmem:[#allocation2 + $0x70] sm:$0xff]
        %v422 = vld [vmem:[#allocation2 + $0x78] sm:$0xff]
        %v423 = vld [vmem:[#allocation2 + $0x80] sm:$0xff]
        %v424 = vld [vmem:[#allocation2 + $0x88] sm:$0xff]
        %v425 = vld [vmem:[#allocation2 + $0x90] sm:$0xff]
        %v426 = vld [vmem:[#allocation2 + $0x98] sm:$0xff]
        %v427 = vld [vmem:[#allocation2 + $0xa0] sm:$0xff]
        %v428 = vld [vmem:[#allocation2 + $0xa8] sm:$0xff]
        %v429 = vld [vmem:[#allocation2 + $0xb0] sm:$0xff]
        %v430 = vld [vmem:[#allocation2 + $0xb8] sm:$0xff]
        %v431 = vld [vmem:[#allocation2 + $0xc0] sm:$0xff]
        %v432 = vld [vmem:[#allocation2 + $0xc8] sm:$0xff]
        %v433 = vld [vmem:[#allocation2 + $0xd0] sm:$0xff]
        %v434 = vld [vmem:[#allocation2 + $0xd8] sm:$0xff]
        %v435 = vld [vmem:[#allocation2 + $0xe0] sm:$0xff]
        %v436 = vld [vmem:[#allocation2 + $0xe8] sm:$0xff]
        %v437 = vld [vmem:[#allocation2 + $0xf0] sm:$0xff]
        %v438 = vld [vmem:[#allocation2 + $0xf8] sm:$0xff]
        %v439 = vld [vmem:[%s4] sm:$0x3]
        %v441 = vperm.slane %v439, 0
        %v442 = vperm.slane %v439, 1
        %v477 = vunpack.c.l.b16 %v407
        %v478 = vunpack.c.h.b16 %v407
        %v479 = vunpack.c.l.b16 %v408
        %v480 = vunpack.c.h.b16 %v408
        %v481 = vunpack.c.l.b16 %v409
        %v482 = vunpack.c.h.b16 %v409
        %v483 = vunpack.c.l.b16 %v410
        %v484 = vunpack.c.h.b16 %v410
        %v485 = vunpack.c.l.b16 %v411
        %v486 = vunpack.c.h.b16 %v411
        %v487 = vunpack.c.l.b16 %v412
        %v488 = vunpack.c.h.b16 %v412
        %v489 = vunpack.c.l.b16 %v413
        %v490 = vunpack.c.h.b16 %v413
        %v491 = vunpack.c.l.b16 %v414
        %v492 = vunpack.c.h.b16 %v414
        %v493 = vunpack.c.l.b16 %v415
        %v494 = vunpack.c.h.b16 %v415
        %v495 = vunpack.c.l.b16 %v416
        %v496 = vunpack.c.h.b16 %v416
        %v497 = vunpack.c.l.b16 %v417
        %v498 = vunpack.c.h.b16 %v417
        %v499 = vunpack.c.l.b16 %v418
        %v500 = vunpack.c.h.b16 %v418
        %v501 = vunpack.c.l.b16 %v419
        %v502 = vunpack.c.h.b16 %v419
        %v503 = vunpack.c.l.b16 %v420
        %v504 = vunpack.c.h.b16 %v420
        %v505 = vunpack.c.l.b16 %v421
        %v506 = vunpack.c.h.b16 %v421
        %v507 = vunpack.c.l.b16 %v422
        %v508 = vunpack.c.h.b16 %v422
        %v509 = vunpack.c.l.b16 %v423
        %v510 = vunpack.c.h.b16 %v423
        %v511 = vunpack.c.l.b16 %v424
        %v512 = vunpack.c.h.b16 %v424
        %v513 = vunpack.c.l.b16 %v425
        %v514 = vunpack.c.h.b16 %v425
        %v515 = vunpack.c.l.b16 %v426
        %v516 = vunpack.c.h.b16 %v426
        %v517 = vunpack.c.l.b16 %v427
        %v518 = vunpack.c.h.b16 %v427
        %v519 = vunpack.c.l.b16 %v428
        %v520 = vunpack.c.h.b16 %v428
        %v521 = vunpack.c.l.b16 %v429
        %v522 = vunpack.c.h.b16 %v429
        %v523 = vunpack.c.l.b16 %v430
        %v524 = vunpack.c.h.b16 %v430
        %v525 = vunpack.c.l.b16 %v431
        %v526 = vunpack.c.h.b16 %v431
        %v527 = vunpack.c.l.b16 %v432
        %v528 = vunpack.c.h.b16 %v432
        %v529 = vunpack.c.l.b16 %v433
        %v530 = vunpack.c.h.b16 %v433
        %v531 = vunpack.c.l.b16 %v434
        %v532 = vunpack.c.h.b16 %v434
        %v533 = vunpack.c.l.b16 %v435
        %v534 = vunpack.c.h.b16 %v435
        %v535 = vunpack.c.l.b16 %v436
        %v536 = vunpack.c.h.b16 %v436
        %v537 = vunpack.c.l.b16 %v437
        %v538 = vunpack.c.h.b16 %v437
        %v539 = vunpack.c.l.b16 %v438
        %v540 = vunpack.c.h.b16 %v438
        %v541 = vpack.c.b16 %v479, %v477
        %v542 = vpack.c.b16 %v480, %v478
        %v543 = vpack.c.b16 %v483, %v481
        %v544 = vpack.c.b16 %v484, %v482
        %v545 = vpack.c.b16 %v487, %v485
        %v546 = vpack.c.b16 %v488, %v486
        %v547 = vpack.c.b16 %v491, %v489
        %v548 = vpack.c.b16 %v492, %v490
        %v549 = vpack.c.b16 %v495, %v493
        %v550 = vpack.c.b16 %v496, %v494
        %v551 = vpack.c.b16 %v499, %v497
        %v552 = vpack.c.b16 %v500, %v498
        %v553 = vpack.c.b16 %v503, %v501
        %v554 = vpack.c.b16 %v504, %v502
        %v555 = vpack.c.b16 %v507, %v505
        %v556 = vpack.c.b16 %v508, %v506
        %v557 = vpack.c.b16 %v511, %v509
        %v558 = vpack.c.b16 %v512, %v510
        %v559 = vpack.c.b16 %v515, %v513
        %v560 = vpack.c.b16 %v516, %v514
        %v561 = vpack.c.b16 %v519, %v517
        %v562 = vpack.c.b16 %v520, %v518
        %v563 = vpack.c.b16 %v523, %v521
        %v564 = vpack.c.b16 %v524, %v522
        %v565 = vpack.c.b16 %v527, %v525
        %v566 = vpack.c.b16 %v528, %v526
        %v567 = vpack.c.b16 %v531, %v529
        %v568 = vpack.c.b16 %v532, %v530
        %v569 = vpack.c.b16 %v535, %v533
        %v570 = vpack.c.b16 %v536, %v534
        %v571 = vpack.c.b16 %v539, %v537
        %v572 = vpack.c.b16 %v540, %v538
        %605 = vmatpush.bf16.msra.mxu0 %v555
        %606 = vmatpush.bf16.msra.mxu0 %v553
        %607 = vmatpush.bf16.msra.mxu0 %v551
        %608 = vmatpush.bf16.msra.mxu0 %v549
        %609 = vmatpush.bf16.msra.mxu0 %v547
        %610 = vmatpush.bf16.msra.mxu0 %v545
        %611 = vmatpush.bf16.msra.mxu0 %v543
        %612 = vmatpush.bf16.msra.mxu0 %v541
        %613 = vmatmul.bf16.gmra.mxu0 %v403
        %v614 = vpop.f32.mrf.mxu0
        %v615 = vadd.f32 %v441, %v614
        %v616 = vpop.f32.mrf.mxu0
        %v617 = vadd.f32 %v441, %v616
        %618 = vmatmul.bf16.gmra.mxu0 %v405
        %v619 = vpop.f32.mrf.mxu0
        %v620 = vadd.f32 %v441, %v619
        %v621 = vpop.f32.mrf.mxu0
        %v622 = vadd.f32 %v441, %v621
        %623 = vdwg.mxu0
        %624 = vmatpush.bf16.msra.mxu0 %v571
        %625 = vmatpush.bf16.msra.mxu0 %v569
        %626 = vmatpush.bf16.msra.mxu0 %v567
        %627 = vmatpush.bf16.msra.mxu0 %v565
        %628 = vmatpush.bf16.msra.mxu0 %v563
        %629 = vmatpush.bf16.msra.mxu0 %v561
        %630 = vmatpush.bf16.msra.mxu0 %v559
        %631 = vmatpush.bf16.msra.mxu0 %v557
        %632 = vmatmul.bf16.gmra.mxu0 %v404
        %v633 = vpop.f32.mrf.mxu0
        %v634 = vadd.f32 %v615, %v633
        %v635 = vpop.f32.mrf.mxu0
        %v636 = vadd.f32 %v617, %v635
        %637 = vmatmul.bf16.gmra.mxu0 %v406
        %v638 = vpop.f32.mrf.mxu0
        %v639 = vadd.f32 %v620, %v638
        %v640 = vpop.f32.mrf.mxu0
        %v641 = vadd.f32 %v622, %v640
        %642 = vdwg.mxu0
        %643 = vmatpush.bf16.msra.mxu0 %v556
        %644 = vmatpush.bf16.msra.mxu0 %v554
        %645 = vmatpush.bf16.msra.mxu0 %v552
        %646 = vmatpush.bf16.msra.mxu0 %v550
        %647 = vmatpush.bf16.msra.mxu0 %v548
        %648 = vmatpush.bf16.msra.mxu0 %v546
        %649 = vmatpush.bf16.msra.mxu0 %v544
        %650 = vmatpush.bf16.msra.mxu0 %v542
        %651 = vmatmul.bf16.gmra.mxu0 %v403
        %v652 = vpop.f32.mrf.mxu0
        %v653 = vadd.f32 %v442, %v652
        %v654 = vpop.f32.mrf.mxu0
        %v655 = vadd.f32 %v442, %v654
        %656 = vmatmul.bf16.gmra.mxu0 %v405
        %v657 = vpop.f32.mrf.mxu0
        %v658 = vadd.f32 %v442, %v657
        %v659 = vpop.f32.mrf.mxu0
        %v660 = vadd.f32 %v442, %v659
        %661 = vdwg.mxu0
        %662 = vmatpush.bf16.msra.mxu0 %v572
        %663 = vmatpush.bf16.msra.mxu0 %v570
        %664 = vmatpush.bf16.msra.mxu0 %v568
        %665 = vmatpush.bf16.msra.mxu0 %v566
        %666 = vmatpush.bf16.msra.mxu0 %v564
        %667 = vmatpush.bf16.msra.mxu0 %v562
        %668 = vmatpush.bf16.msra.mxu0 %v560
        %669 = vmatpush.bf16.msra.mxu0 %v558
        %670 = vmatmul.bf16.gmra.mxu0 %v404
        %v671 = vpop.f32.mrf.mxu0
        %v672 = vadd.f32 %v653, %v671
        %v673 = vpop.f32.mrf.mxu0
        %v674 = vadd.f32 %v655, %v673
        %675 = vmatmul.bf16.gmra.mxu0 %v406
        %v676 = vpop.f32.mrf.mxu0
        %v677 = vadd.f32 %v658, %v676
        %v678 = vpop.f32.mrf.mxu0
        %v679 = vadd.f32 %v660, %v678
        %680 = vdwg.mxu0
        %v681 = vmax.f32 %v634, 0.0
        %v682 = vmax.f32 %v672, 0.0
        %v683 = vmax.f32 %v636, 0.0
        %v684 = vmax.f32 %v674, 0.0
        %v685 = vmax.f32 %v639, 0.0
        %v686 = vmax.f32 %v677, 0.0
        %v687 = vmax.f32 %v641, 0.0
        %v688 = vmax.f32 %v679, 0.0
        %v689 = vpack.c.bf16 %v683, %v681
        %v690 = vpack.c.bf16 %v684, %v682
        %v691 = vpack.c.bf16 %v687, %v685
        %v692 = vpack.c.bf16 %v688, %v686
        %v693 = vld [vmem:[#allocation4] sm:$0xf]
        %v694 = vld [vmem:[#allocation4 + $0x4] sm:$0xf]
        %v695 = vld [vmem:[#allocation4 + $0x8] sm:$0xf]
        %v696 = vld [vmem:[#allocation4 + $0xc] sm:$0xf]
        %v697 = vld [vmem:[#allocation4 + $0x10] sm:$0xf]
        %v698 = vld [vmem:[#allocation4 + $0x14] sm:$0xf]
        %v699 = vld [vmem:[#allocation4 + $0x18] sm:$0xf]
        %v700 = vld [vmem:[#allocation4 + $0x1c] sm:$0xf]
        %v701 = vld [vmem:[#allocation4 + $0x20] sm:$0xf]
        %v702 = vld [vmem:[#allocation4 + $0x24] sm:$0xf]
        %v703 = vld [vmem:[#allocation4 + $0x28] sm:$0xf]
        %v704 = vld [vmem:[#allocation4 + $0x2c] sm:$0xf]
        %v705 = vld [vmem:[#allocation4 + $0x30] sm:$0xf]
        %v706 = vld [vmem:[#allocation4 + $0x34] sm:$0xf]
        %v707 = vld [vmem:[#allocation4 + $0x38] sm:$0xf]
        %v708 = vld [vmem:[#allocation4 + $0x3c] sm:$0xf]
        %v709 = vld [vmem:[#allocation4 + $0x40] sm:$0xf]
        %v710 = vld [vmem:[#allocation4 + $0x44] sm:$0xf]
        %v711 = vld [vmem:[#allocation4 + $0x48] sm:$0xf]
        %v712 = vld [vmem:[#allocation4 + $0x4c] sm:$0xf]
        %v713 = vld [vmem:[#allocation4 + $0x50] sm:$0xf]
        %v714 = vld [vmem:[#allocation4 + $0x54] sm:$0xf]
        %v715 = vld [vmem:[#allocation4 + $0x58] sm:$0xf]
        %v716 = vld [vmem:[#allocation4 + $0x5c] sm:$0xf]
        %v717 = vld [vmem:[#allocation4 + $0x60] sm:$0xf]
        %v718 = vld [vmem:[#allocation4 + $0x64] sm:$0xf]
        %v719 = vld [vmem:[#allocation4 + $0x68] sm:$0xf]
        %v720 = vld [vmem:[#allocation4 + $0x6c] sm:$0xf]
        %v721 = vld [vmem:[#allocation4 + $0x70] sm:$0xf]
        %v722 = vld [vmem:[#allocation4 + $0x74] sm:$0xf]
        %v723 = vld [vmem:[#allocation4 + $0x78] sm:$0xf]
        %v724 = vld [vmem:[#allocation4 + $0x7c] sm:$0xf]
        %v725 = vld [vmem:[%s6] sm:$0x1]
        %v727 = vperm.slane %v725, 0
        %v761 = vunpack.c.l.b16 %v693
        %v762 = vunpack.c.l.b16 %v694
        %v763 = vunpack.c.l.b16 %v695
        %v764 = vunpack.c.l.b16 %v696
        %v765 = vunpack.c.l.b16 %v697
        %v766 = vunpack.c.l.b16 %v698
        %v767 = vunpack.c.l.b16 %v699
        %v768 = vunpack.c.l.b16 %v700
        %v769 = vunpack.c.l.b16 %v701
        %v770 = vunpack.c.l.b16 %v702
        %v771 = vunpack.c.l.b16 %v703
        %v772 = vunpack.c.l.b16 %v704
        %v773 = vunpack.c.l.b16 %v705
        %v774 = vunpack.c.l.b16 %v706
        %v775 = vunpack.c.l.b16 %v707
        %v776 = vunpack.c.l.b16 %v708
        %v777 = vunpack.c.l.b16 %v709
        %v778 = vunpack.c.l.b16 %v710
        %v779 = vunpack.c.l.b16 %v711
        %v780 = vunpack.c.l.b16 %v712
        %v781 = vunpack.c.l.b16 %v713
        %v782 = vunpack.c.l.b16 %v714
        %v783 = vunpack.c.l.b16 %v715
        %v784 = vunpack.c.l.b16 %v716
        %v785 = vunpack.c.l.b16 %v717
        %v786 = vunpack.c.l.b16 %v718
        %v787 = vunpack.c.l.b16 %v719
        %v788 = vunpack.c.l.b16 %v720
        %v789 = vunpack.c.l.b16 %v721
        %v790 = vunpack.c.l.b16 %v722
        %v791 = vunpack.c.l.b16 %v723
        %v792 = vunpack.c.l.b16 %v724
        %v793 = vpack.c.b16 %v762, %v761
        %v794 = vpack.c.b16 %v764, %v763
        %v795 = vpack.c.b16 %v766, %v765
        %v796 = vpack.c.b16 %v768, %v767
        %v797 = vpack.c.b16 %v770, %v769
        %v798 = vpack.c.b16 %v772, %v771
        %v799 = vpack.c.b16 %v774, %v773
        %v800 = vpack.c.b16 %v776, %v775
        %v801 = vpack.c.b16 %v778, %v777
        %v802 = vpack.c.b16 %v780, %v779
        %v803 = vpack.c.b16 %v782, %v781
        %v804 = vpack.c.b16 %v784, %v783
        %v805 = vpack.c.b16 %v786, %v785
        %v806 = vpack.c.b16 %v788, %v787
        %v807 = vpack.c.b16 %v790, %v789
        %v808 = vpack.c.b16 %v792, %v791
        %825 = vmatpush.bf16.msra.mxu0 %v800
        %826 = vmatpush.bf16.msra.mxu0 %v799
        %827 = vmatpush.bf16.msra.mxu0 %v798
        %828 = vmatpush.bf16.msra.mxu0 %v797
        %829 = vmatpush.bf16.msra.mxu0 %v796
        %830 = vmatpush.bf16.msra.mxu0 %v795
        %831 = vmatpush.bf16.msra.mxu0 %v794
        %832 = vmatpush.bf16.msra.mxu0 %v793
        %833 = vmatmul.bf16.gmra.mxu0 %v689
        %v834 = vpop.f32.mrf.mxu0
        %v835 = vadd.f32 %v727, %v834
        %v836 = vpop.f32.mrf.mxu0
        %v837 = vadd.f32 %v727, %v836
        %838 = vmatmul.bf16.gmra.mxu0 %v691
        %v839 = vpop.f32.mrf.mxu0
        %v840 = vadd.f32 %v727, %v839
        %v841 = vpop.f32.mrf.mxu0
        %v842 = vadd.f32 %v727, %v841
        %843 = vdwg.mxu0
        %844 = vmatpush.bf16.msra.mxu0 %v808
        %845 = vmatpush.bf16.msra.mxu0 %v807
        %846 = vmatpush.bf16.msra.mxu0 %v806
        %847 = vmatpush.bf16.msra.mxu0 %v805
        %848 = vmatpush.bf16.msra.mxu0 %v804
        %849 = vmatpush.bf16.msra.mxu0 %v803
        %850 = vmatpush.bf16.msra.mxu0 %v802
        %851 = vmatpush.bf16.msra.mxu0 %v801
        %852 = vmatmul.bf16.gmra.mxu0 %v690
        %v853 = vpop.f32.mrf.mxu0
        %v854 = vadd.f32 %v835, %v853
        %v855 = vpop.f32.mrf.mxu0
        %v856 = vadd.f32 %v837, %v855
        %857 = vmatmul.bf16.gmra.mxu0 %v692
        %v858 = vpop.f32.mrf.mxu0
        %v859 = vadd.f32 %v840, %v858
        %v860 = vpop.f32.mrf.mxu0
        %v861 = vadd.f32 %v842, %v860
        %862 = vdwg.mxu0
        %v863 = vtanh.pop %v854
        %v864 = vtanh.pop %v856
        %v865 = vtanh.pop %v859
        %v866 = vtanh.pop %v861
        %v867 = vpack.c.bf16 %v863, %v863
        %v868 = vpack.c.bf16 %v864, %v864
        %v869 = vpack.c.bf16 %v865, %v865
        %v870 = vpack.c.bf16 %v866, %v866
        %871 = vst [vmem:[%s314] sm:$0xf] %v867
        %872 = vst [vmem:[%s314 + $0x4] sm:$0xf] %v868
        %873 = vst [vmem:[%s314 + $0x8] sm:$0xf] %v869
        %874 = vst [vmem:[%s314 + $0xc] sm:$0xf] %v870
        %s875 = smul.u32 4, %s20
        %p876 = scmp.lt.s32.totalorder %s875, 7
        %s877 = scalar_select %p876, %s875, 7
        %s878 = smul.addr %s877, 4
        %s879 = scalar_lea.vmem %s7, %s878
        // Predicated region
        $region57: #{actor_forward.1} parent=47 // pred_check
          %p880 = pneg %p190
        $region58: #{actor_forward.1} parent=47 // pred_check_branch
          %882 = sbr.rel (%p880) target = $region60
        $region59: #{actor_forward.1} parent=47 // pred_region
          %s883 = smul.u32 4, %s20
        $region60: #{actor_forward.1} parent=47 // pred_fallthru
          _
      $region48: #{actor_forward.1} parent=5 // pred_fallthru
        _
      %p884 = scmp.le.s32.totalorder 2, %s15
      // Predicated region
      $region61: #{actor_forward.1} parent=5 // pred_check
        %p885 = pneg %p884
      $region62: #{actor_forward.1} parent=5 // pred_check_branch
        %887 = sbr.rel (%p885) target = $region64
      $region63: #{actor_forward.1} parent=5 // pred_region
        %s888 = ssub.s32 %s15, 2
        // Predicated region
        $region65: #{actor_forward.1} parent=63 // pred_check
          %p889 = pneg %p196
        $region66: #{actor_forward.1} parent=63 // pred_check_branch
          %891 = sbr.rel (%p889) target = $region68
        $region67: #{actor_forward.1} parent=63 // pred_region
          %s892 = smul.u32 4, %s21
          %p893 = scmp.lt.s32.totalorder %s892, 7
          %s894 = scalar_select %p893, %s892, 7
          %s895 = smul.addr %s894, 4
          %s896 = scalar_lea.vmem %s7, %s895
        $region68: #{actor_forward.1} parent=63 // pred_fallthru
          _
      $region64: #{actor_forward.1} parent=5 // pred_fallthru
        _
    $region6: #{actor_forward.1} parent=1 // loop_footer
      %s19 = sadd.s32 1, %s15
    $region7: #{actor_forward.1} parent=1 // loop_footer_branch
      %14 = sbr.rel target = $region3
    $region8: #{actor_forward.1} parent=1 // loop_exit
      _
    %897 = vsyncpa [#allocation3], 1
    %s898 = scalar_lea.sflag [#allocation3], 1
    %899 = vsyncpa %s898, 1
    %900 = vsyncpa [#allocation5], 1

</llo_original>
